<compile_context>
chip_gen: v6e
topology: v6e:2x2x1
jax: 0.10.0
libtpu: 0.0.40
codegen_flags: <defaults>
</compile_context>

<pallas_src>
import functools

import jax
import jax.numpy as jnp
from jax import lax
from jax.experimental import pallas as pl
from jax.experimental.pallas import tpu as pltpu


def _warp_kernel(base_ref, img_ref, flow_ref, out_ref, acc_ref, *, H, W, TH, C):
    """One (batch, output-pixel-tile, source-row-band) grid step.

    base_ref : (2, TP)        f32  base pixel coords of the tile's output pixels
                                   (row 0 = x/col j, row 1 = y/row i)
    img_ref  : (1, C, TH, W)  bf16 one row-band of the source image
    flow_ref : (1, 2, TP)     f32  flow (x, y) in pixels for the output tile
    out_ref  : (1, C, TP)          warped output tile (written at the last band)
    acc_ref  : (C, TP)        f32  accumulator across row-bands
    """
    k = pl.program_id(2)
    nk = pl.num_programs(2)

    @pl.when(k == 0)
    def _():
        acc_ref[...] = jnp.zeros_like(acc_ref)

    base = base_ref[...]                                   # (2, TP)
    flow = flow_ref[0]                                     # (2, TP) lane-dense
    TP = base.shape[1]

    # Sample location in pixels, clamped to the border (padding_mode='border').
    x = jnp.clip(base[0:1, :] + flow[0:1, :], 0.0, float(W - 1))   # (1, TP)
    y = jnp.clip(base[1:2, :] + flow[1:2, :], 0.0, float(H - 1))   # (1, TP)

    # Separable bilinear "tent" weights.  For clamped x/y this reproduces the
    # usual (1-w)/w split over floor/ceil with weight 1 at the border.
    # Column weights feed the MXU -> bf16; row weights stay f32 on the VPU.
    col = lax.broadcasted_iota(jnp.int32, (W, TP), 0).astype(jnp.float32)
    tx = jnp.maximum(1.0 - jnp.abs(col - x), 0.0).astype(jnp.bfloat16)  # (W, TP)

    row0 = (k * TH).astype(jnp.float32)
    row = lax.broadcasted_iota(jnp.int32, (TH, TP), 0).astype(jnp.float32) + row0
    ty = jnp.maximum(1.0 - jnp.abs(row - y), 0.0)                        # (TH, TP)

    # Stage 1 (MXU): contract the column axis with a tall (C*TH, W) LHS.
    # TODO(synk): for heights that are not a multiple of 16 (and != TH band),
    # this reshape may insert a relayout copy; pick TH accordingly.
    img = img_ref[0]                                                     # (C, TH, W)
    tmp = jnp.dot(img.reshape(C * TH, W), tx,
                  preferred_element_type=jnp.float32)                    # (C*TH, TP)

    # Stage 2 (VPU/XLU): weighted reduce over the rows of this band (f32).
    tmp = tmp.reshape(C, TH, TP)
    acc_ref[...] += jnp.sum(tmp * ty[None, :, :], axis=1)

    @pl.when(k == nk - 1)
    def _():
        out_ref[0] = acc_ref[...].astype(out_ref.dtype)


def _vmem_capacity_bytes():
    """Per-core VMEM capacity (generation aware) with a conservative fallback."""
    try:
        info = pltpu.get_tpu_info()
        for attr in ("vmem_capacity_bytes", "vmem_bytes", "vmem_size_bytes"):
            v = getattr(info, attr, None)
            if v:
                return int(v)
    except Exception:
        pass
    return 64 << 20   # v7x per-TensorCore; v5e/v6e have 128 MiB


def _working_set_bytes(C, H, W, TP, TH):
    """Per-step VMEM working set: intermediates counted once, per-iteration
    I/O blocks double-buffered."""
    th_pad = -(-TH // 16) * 16
    c_pad = -(-C // 8) * 8
    tx = W * TP * (2 + 8)                   # bf16 Tx + f32 build temporaries
    ty = TH * TP * (4 + 8)                  # f32 Ty + build temporaries
    tmp = C * TH * TP * 4 * 2               # stage-1 result + weighted product
    acc = c_pad * TP * 4                    # scratch accumulator
    img = 2 * C * th_pad * W * 2            # double-buffered bf16 image band
    small = 2 * (8 * TP * 4) * 2 + 2 * c_pad * TP * 4   # base/flow/out blocks
    return tx + ty + tmp + acc + img + small


def _pick_tiles(C, H, W, budget):
    """Largest lane tile TP (multiple of 128 dividing H*W) and row band TH
    (multiple of 16 dividing H, preferring the full height) fitting budget."""
    HW = H * W
    if HW % 128 == 0:
        tp_cands = sorted({t for t in range(128, min(HW, 2048) + 1, 128)
                           if HW % t == 0}, reverse=True)
    else:
        # TODO(synk): pad the flattened spatial dim to a multiple of 128 for
        # large non-aligned images; small images run as one full-extent tile.
        tp_cands = [HW]
    th_cands = sorted({t for t in range(16, H + 1, 16) if H % t == 0} | {H},
                      reverse=True)
    for tp in tp_cands:
        for th in th_cands:
            if _working_set_bytes(C, H, W, tp, th) <= budget:
                return tp, th
    return tp_cands[-1], th_cands[-1]


def flow_warp(img_input, img_flow, *, tile_p=None, tile_h=None):
    """Pallas equivalent of FlowWarpper.forward (NCHW in / NCHW out)."""
    B, C, H, W = img_input.shape
    assert img_flow.shape == (B, 2, H, W)
    HW = H * W

    vmem_cap = _vmem_capacity_bytes()
    budget = int(0.45 * vmem_cap)
    TP, TH = _pick_tiles(C, H, W, budget)
    if tile_p is not None:
        TP = tile_p
    if tile_h is not None:
        TH = tile_h
    assert HW % TP == 0 and H % TH == 0
    assert (TP % 128 == 0) or (TP == HW)
    assert (TH % 16 == 0) or (TH == H)
    n_p = HW // TP
    n_k = H // TH

    # Glue reshapes / casts (outside the kernel, done once):
    img_bf16 = img_input.astype(jnp.bfloat16)
    flow_flat = img_flow.reshape(B, 2, HW).astype(jnp.float32)

    # Base pixel coordinates of every output pixel, lane-dense (2, HW).
    pix = jnp.arange(HW, dtype=jnp.int32)
    base_xy = jnp.stack([pix % W, pix // W], axis=0).astype(jnp.float32)

    kernel = functools.partial(_warp_kernel, H=H, W=W, TH=TH, C=C)

    ws = _working_set_bytes(C, H, W, TP, TH)
    vmem_limit = int(min(vmem_cap, max(32 << 20, 2 * ws)))

    bytes_accessed = (2 * B * C * HW * (n_p if n_k > 1 else 1)  # bf16 image
                      + 4 * B * 2 * HW                          # f32 flow
                      + 4 * B * C * HW                          # f32 output
                      + 4 * 2 * HW)                             # base coords
    cost = pl.CostEstimate(
        flops=2 * B * C * H * W * HW + 2 * B * C * H * HW,
        transcendentals=0,
        bytes_accessed=int(bytes_accessed),
    )

    out_flat = pl.pallas_call(
        kernel,
        out_shape=jax.ShapeDtypeStruct((B, C, HW), img_input.dtype),
        grid_spec=pltpu.PrefetchScalarGridSpec(
            num_scalar_prefetch=0,
            grid=(B, n_p, n_k),
            in_specs=[
                pl.BlockSpec((2, TP), lambda b, p, k: (0, p)),             # base
                pl.BlockSpec((1, C, TH, W), lambda b, p, k: (b, 0, k, 0)),  # img
                pl.BlockSpec((1, 2, TP), lambda b, p, k: (b, 0, p)),       # flow
            ],
            out_specs=pl.BlockSpec((1, C, TP), lambda b, p, k: (b, 0, p)),
            scratch_shapes=[pltpu.VMEM((C, TP), jnp.float32)],
        ),
        compiler_params=pltpu.CompilerParams(
            dimension_semantics=("parallel", "parallel", "arbitrary"),
            vmem_limit_bytes=vmem_limit,
        ),
        cost_estimate=cost,
    )(base_xy, img_bf16, flow_flat)

    return out_flat.reshape(B, C, H, W)


def _flow_warp_reference(img_input, img_flow):
    """Pure-JAX reference (same grid_sample semantics) for verification."""
    def one(img, flow):                           # img (C,H,W), flow (2,H,W)
        C, H, W = img.shape
        jj = lax.broadcasted_iota(jnp.float32, (H, W), 1)
        ii = lax.broadcasted_iota(jnp.float32, (H, W), 0)
        x = jnp.clip(jj + flow[0], 0.0, W - 1.0)
        y = jnp.clip(ii + flow[1], 0.0, H - 1.0)
        x0 = jnp.floor(x); y0 = jnp.floor(y)
        wx = x - x0; wy = y - y0
        x0i = x0.astype(jnp.int32); y0i = y0.astype(jnp.int32)
        x1i = jnp.minimum(x0i + 1, W - 1); y1i = jnp.minimum(y0i + 1, H - 1)
        g = lambda yi, xi: img[:, yi, xi]
        return (g(y0i, x0i) * (1 - wy) * (1 - wx)
                + g(y0i, x1i) * (1 - wy) * wx
                + g(y1i, x0i) * wy * (1 - wx)
                + g(y1i, x1i) * wy * wx)
    return jax.vmap(one)(img_input, img_flow)


if __name__ == "__main__":
    # FlowWarpper has no learnable parameters (only a cached base grid).
    def run_case(B, C, H, W, flow_scale, key, **tiles):
        k_img, k_flow = jax.random.split(key)
        img = jax.random.normal(k_img, (B, C, H, W), dtype=jnp.float32)
        flow = flow_scale * jax.random.normal(k_flow, (B, 2, H, W),
                                              dtype=jnp.float32)
        out = flow_warp(img, flow, **tiles)
        jax.block_until_ready(out)
        ref = _flow_warp_reference(img, flow)
        assert out.shape == (B, C, H, W)
        err = float(jnp.max(jnp.abs(out - ref)))
        assert err < 2e-2, f"mismatch vs reference: {err}"

    key = jax.random.PRNGKey(0)
    k1, k2, k3 = jax.random.split(key, 3)
    run_case(2, 4, 16, 16, 3.0, k1)                          # single tile / band
    run_case(1, 3, 32, 32, 5.0, k2)                          # auto tile selection
    run_case(2, 4, 32, 32, 6.0, k3, tile_p=256, tile_h=16)   # n_p=4, n_k=2 path
    print("KERNEL_OK")
</pallas_src>

<mosaic_0001>
module attributes {stable_mosaic.version = 11 : i64} {
  func.func @_warp_kernel(%arg0: i32, %arg1: i32, %arg2: i32, %arg3: memref<2x256xf32, #tpu.memory_space<vmem>>, %arg4: memref<1x4x16x16xbf16, #tpu.memory_space<vmem>>, %arg5: memref<1x2x256xf32, #tpu.memory_space<vmem>>, %arg6: memref<1x4x256xf32, #tpu.memory_space<vmem>>, %arg7: memref<4x256xf32, #tpu.memory_space<vmem>>) attributes {dimension_semantics = [#tpu.dimension_semantics<parallel>, #tpu.dimension_semantics<parallel>, #tpu.dimension_semantics<arbitrary>], iteration_bounds = array<i64: 2, 1, 1>, scalar_prefetch = 0 : i64, scratch_operands = 1 : i64, tpu.core_type = #tpu.core_type<tc>, window_params = [{transform_indices = @transform_0, window_bounds = array<i64: 2, 256>}, {transform_indices = @transform_1, window_bounds = array<i64: 1, 4, 16, 16>}, {transform_indices = @transform_2, window_bounds = array<i64: 1, 2, 256>}, {transform_indices = @transform_3, window_bounds = array<i64: 1, 4, 256>}]} {
    %c0_i32 = arith.constant 0 : i32
    %0 = arith.cmpi eq, %arg2, %c0_i32 : i32
    %1 = arith.extui %0 : i1 to i32
    %c0_i32_0 = arith.constant 0 : i32
    %2 = arith.cmpi ne, %1, %c0_i32_0 : i32
    scf.if %2 {
      %cst_24 = arith.constant 0.000000e+00 : f32
      %58 = vector.broadcast %cst_24 : f32 to vector<4x256xf32>
      %c0_25 = arith.constant 0 : index
      %c0_26 = arith.constant 0 : index
      %59 = vector.load %arg7[%c0_25, %c0_26] : memref<4x256xf32, #tpu.memory_space<vmem>>, vector<4x256xf32>
      tpu.vector_store %arg7[%c0_25, %c0_26], %58 {strides = array<i32>} : memref<4x256xf32, #tpu.memory_space<vmem>>, vector<4x256xf32>,
    } else {
    }
    %c0 = arith.constant 0 : index
    %c0_1 = arith.constant 0 : index
    %3 = vector.load %arg3[%c0, %c0_1] : memref<2x256xf32, #tpu.memory_space<vmem>>, vector<2x256xf32>
    %c0_2 = arith.constant 0 : index
    %c0_3 = arith.constant 0 : index
    %c0_4 = arith.constant 0 : index
    %4 = vector.load %arg5[%c0_2, %c0_3, %c0_4] : memref<1x2x256xf32, #tpu.memory_space<vmem>>, vector<1x2x256xf32>
    %5 = vector.shape_cast %4 : vector<1x2x256xf32> to vector<2x256xf32>
    %6 = vector.extract_strided_slice %3 {offsets = [0, 0], sizes = [1, 256], strides = [1, 1]} : vector<2x256xf32> to vector<1x256xf32>
    %7 = vector.extract_strided_slice %5 {offsets = [0, 0], sizes = [1, 256], strides = [1, 1]} : vector<2x256xf32> to vector<1x256xf32>
    %8 = arith.addf %6, %7 : vector<1x256xf32>
    %cst = arith.constant 0.000000e+00 : f32
    %cst_5 = arith.constant 1.500000e+01 : f32
    %9 = vector.broadcast %cst : f32 to vector<1x256xf32>
    %10 = arith.maximumf %9, %8 : vector<1x256xf32>
    %11 = vector.broadcast %cst_5 : f32 to vector<1x256xf32>
    %12 = arith.minimumf %11, %10 : vector<1x256xf32>
    %13 = vector.extract_strided_slice %3 {offsets = [1, 0], sizes = [1, 256], strides = [1, 1]} : vector<2x256xf32> to vector<1x256xf32>
    %14 = vector.extract_strided_slice %5 {offsets = [1, 0], sizes = [1, 256], strides = [1, 1]} : vector<2x256xf32> to vector<1x256xf32>
    %15 = arith.addf %13, %14 : vector<1x256xf32>
    %cst_6 = arith.constant 0.000000e+00 : f32
    %cst_7 = arith.constant 1.500000e+01 : f32
    %16 = vector.broadcast %cst_6 : f32 to vector<1x256xf32>
    %17 = arith.maximumf %16, %15 : vector<1x256xf32>
    %18 = vector.broadcast %cst_7 : f32 to vector<1x256xf32>
    %19 = arith.minimumf %18, %17 : vector<1x256xf32>
    %20 = tpu.iota {dimensions = array<i32: 0>} : vector<16x256xi32>
    %21 = arith.sitofp %20 : vector<16x256xi32> to vector<16x256xf32>
    %22 = vector.broadcast %12 : vector<1x256xf32> to vector<16x256xf32>
    %23 = arith.subf %21, %22 : vector<16x256xf32>
    %24 = math.absf %23 : vector<16x256xf32>
    %cst_8 = arith.constant 1.000000e+00 : f32
    %25 = vector.broadcast %cst_8 : f32 to vector<16x256xf32>
    %26 = arith.subf %25, %24 : vector<16x256xf32>
    %cst_9 = arith.constant 0.000000e+00 : f32
    %27 = vector.broadcast %cst_9 : f32 to vector<16x256xf32>
    %28 = arith.maximumf %26, %27 : vector<16x256xf32>
    %29 = arith.truncf %28 : vector<16x256xf32> to vector<16x256xbf16>
    %c16_i32 = arith.constant 16 : i32
    %30 = arith.muli %arg2, %c16_i32 : i32
    %31 = arith.sitofp %30 : i32 to f32
    %32 = tpu.iota {dimensions = array<i32: 0>} : vector<16x256xi32>
    %33 = arith.sitofp %32 : vector<16x256xi32> to vector<16x256xf32>
    %34 = vector.broadcast %31 : f32 to vector<16x256xf32>
    %35 = arith.addf %33, %34 : vector<16x256xf32>
    %36 = vector.broadcast %19 : vector<1x256xf32> to vector<16x256xf32>
    %37 = arith.subf %35, %36 : vector<16x256xf32>
    %38 = math.absf %37 : vector<16x256xf32>
    %cst_10 = arith.constant 1.000000e+00 : f32
    %39 = vector.broadcast %cst_10 : f32 to vector<16x256xf32>
    %40 = arith.subf %39, %38 : vector<16x256xf32>
    %cst_11 = arith.constant 0.000000e+00 : f32
    %41 = vector.broadcast %cst_11 : f32 to vector<16x256xf32>
    %42 = arith.maximumf %40, %41 : vector<16x256xf32>
    %c0_12 = arith.constant 0 : index
    %c0_13 = arith.constant 0 : index
    %c0_14 = arith.constant 0 : index
    %c0_15 = arith.constant 0 : index
    %43 = vector.load %arg4[%c0_12, %c0_13, %c0_14, %c0_15] : memref<1x4x16x16xbf16, #tpu.memory_space<vmem>>, vector<1x4x16x16xbf16>
    %44 = vector.shape_cast %43 : vector<1x4x16x16xbf16> to vector<4x16x16xbf16>
    %45 = vector.shape_cast %44 : vector<4x16x16xbf16> to vector<64x16xbf16>
    %cst_16 = arith.constant dense<0.000000e+00> : vector<64x256xf32>
    %46 = tpu.matmul %45, %29, %cst_16 {dimension_numbers = #tpu.dot_dimension_numbers<[1], [0], [0], [1], [0, 0, 1, 1], [], []>} : vector<64x16xbf16>, vector<16x256xbf16>, vector<64x256xf32> -> vector<64x256xf32>
    %47 = vector.shape_cast %46 : vector<64x256xf32> to vector<4x16x256xf32>
    %c0_17 = arith.constant 0 : index
    %c0_18 = arith.constant 0 : index
    %48 = vector.load %arg7[%c0_17, %c0_18] : memref<4x256xf32, #tpu.memory_space<vmem>>, vector<4x256xf32>
    %49 = vector.shape_cast %42 : vector<16x256xf32> to vector<1x16x256xf32>
    %50 = vector.broadcast %49 : vector<1x16x256xf32> to vector<4x16x256xf32>
    %51 = arith.mulf %47, %50 : vector<4x16x256xf32>
    %cst_19 = arith.constant dense<0.000000e+00> : vector<4x256xf32>
    %52 = vector.multi_reduction <add>, %51, %cst_19 [1] : vector<4x16x256xf32> to vector<4x256xf32>
    %53 = arith.addf %48, %52 : vector<4x256xf32>
    %c0_20 = arith.constant 0 : index
    %c0_21 = arith.constant 0 : index
    %54 = vector.load %arg7[%c0_20, %c0_21] : memref<4x256xf32, #tpu.memory_space<vmem>>, vector<4x256xf32>
    tpu.vector_store %arg7[%c0_20, %c0_21], %53 {strides = array<i32>} : memref<4x256xf32, #tpu.memory_space<vmem>>, vector<4x256xf32>,
    %c0_i32_22 = arith.constant 0 : i32
    %55 = arith.cmpi eq, %arg2, %c0_i32_22 : i32
    %56 = arith.extui %55 : i1 to i32
    %c0_i32_23 = arith.constant 0 : i32
    %57 = arith.cmpi ne, %56, %c0_i32_23 : i32
    scf.if %57 {
      %c0_24 = arith.constant 0 : index
      %c0_25 = arith.constant 0 : index
      %58 = vector.load %arg7[%c0_24, %c0_25] : memref<4x256xf32, #tpu.memory_space<vmem>>, vector<4x256xf32>
      %c0_26 = arith.constant 0 : index
      %c0_27 = arith.constant 0 : index
      %c0_28 = arith.constant 0 : index
      %59 = vector.load %arg6[%c0_26, %c0_27, %c0_28] : memref<1x4x256xf32, #tpu.memory_space<vmem>>, vector<1x4x256xf32>
      %60 = vector.shape_cast %59 : vector<1x4x256xf32> to vector<4x256xf32>
      %61 = vector.shape_cast %58 : vector<4x256xf32> to vector<1x4x256xf32>
      tpu.vector_store %arg6[%c0_26, %c0_27, %c0_28], %61 {strides = array<i32>} : memref<1x4x256xf32, #tpu.memory_space<vmem>>, vector<1x4x256xf32>,
    } else {
    }
    return
  }
  func.func @transform_0(%arg0: i32, %arg1: i32, %arg2: i32) -> (i32, i32) {
    %c0_i32 = arith.constant 0 : i32
    %c0_i32_0 = arith.constant 0 : i32
    return %c0_i32, %arg1 : i32, i32
  }
  func.func @transform_1(%arg0: i32, %arg1: i32, %arg2: i32) -> (i32, i32, i32, i32) {
    %c0_i32 = arith.constant 0 : i32
    %c0_i32_0 = arith.constant 0 : i32
    %c0_i32_1 = arith.constant 0 : i32
    return %arg0, %c0_i32, %arg2, %c0_i32_0 : i32, i32, i32, i32
  }
  func.func @transform_2(%arg0: i32, %arg1: i32, %arg2: i32) -> (i32, i32, i32) {
    %c0_i32 = arith.constant 0 : i32
    %c0_i32_0 = arith.constant 0 : i32
    return %arg0, %c0_i32, %arg1 : i32, i32, i32
  }
  func.func @transform_3(%arg0: i32, %arg1: i32, %arg2: i32) -> (i32, i32, i32) {
    %c0_i32 = arith.constant 0 : i32
    %c0_i32_0 = arith.constant 0 : i32
    return %arg0, %c0_i32, %arg1 : i32, i32, i32
  }
}

</mosaic_0001>

<llo_original>
// kernel: tpu_custom_call.1
$region0: #{tpu_custom_call.1}
  #allocation0 [shape = 'u32[]', space=smem, size = 0x4, offset = 0x4, fixed_abs, tag = 'smem constant byte address 0x4 - core index']
  #allocation1 [shape = 'u32[144,128]{1,0:T(1,128)}', space=vmem, size = 0x12000, scoped, tag = 'internal scratch']
  #allocation2 [shape = 'f32[4,256]{1,0:T(4,128)}', space=vmem, size = 0x1000, scoped, tag = 'scratch operand']
  %s0 = inlined_call_operand.hbm [shape: f32[2,256], index: 0, kind: input, shape index: {}]
  %s1 = inlined_call_operand.hbm [shape: bf16[2,4,16,16], index: 1, kind: input, shape index: {}]
  %s2 = inlined_call_operand.hbm [shape: f32[2,2,256], index: 2, kind: input, shape index: {}]
  %s3 = inlined_call_operand.hbm [shape: f32[2,4,256], index: 3, kind: output, shape index: {}]
  %s4 = sld [smem:[#allocation0]]
  $region65: #{tpu_custom_call.1} parent=0
    _
  %s6 = ssub.s32 1, %s4
  %s7 = scalar_select 0, %s6, %s4
  $region1: #{tpu_custom_call.1} parent=0
    #allocation3 [shape = 'u8[2048]{0}', space=vmem, size = 0x800, scoped, tag = 'input window, operand 0, single buffered']
    #allocation4 [shape = 's32[2]{0}', space=sflag, size = 0x8, scoped, tag = 'scoped memory for tpu_custom_call.1']
    #allocation5 [shape = 's32[2]{0}', space=sflag, size = 0x8, scoped, tag = 'scoped memory for tpu_custom_call.1']
    #allocation6 [shape = 'u8[32768]{0}', space=vmem, size = 0x8000, scoped, tag = 'input window, operand 1']
    #allocation7 [shape = 's32[2]{0}', space=sflag, size = 0x8, scoped, tag = 'scoped memory for tpu_custom_call.1']
    #allocation8 [shape = 'u8[4096]{0}', space=vmem, size = 0x1000, scoped, tag = 'input window, operand 2']
    #allocation9 [shape = 'u8[8192]{0}', space=vmem, size = 0x2000, scoped, tag = 'output window, operand 0']
    %8 = vsyncpa [#allocation4], 0
    %9 = vsyncpa [#allocation7], 0
    %s10 = scalar_lea.sflag [#allocation7], 1
    %11 = vsyncpa %s10, 0
    %12 = vsyncpa [#allocation5], 0
    %s13 = scalar_lea.sflag [#allocation5], 1
    %14 = vsyncpa %s13, 0
    loop: start=0, step=1, limit=4
    $region2: #{tpu_custom_call.1} parent=1 // loop_pre_header
      _
    $region3: #{tpu_custom_call.1} parent=1 // loop_header
      %s16 = sphi 0, %s20
      %p17 = scmp.ge.s32.totalorder %s16, 4
      %s23 = sphi 0, %s42
      %s24 = sphi 0, %s38
      %s25 = sphi 0, %s34
      %s26 = sphi 0, %s23
      %s27 = sphi 0, %s24
      %s28 = sphi 0, %s25
      %s29 = sphi 0, %s26
      %s30 = sphi 0, %s27
      %s31 = sphi 0, %s28
      %s45 = sphi 0, %s47
      %s48 = sphi 0, %s45
      %s49 = sphi 0, %s48
      %s65 = sphi 0, %s49
      %s73 = sphi 0, %s75
      %s76 = sphi 0, %s73
      %s77 = sphi 0, %s76
      %s93 = sphi 0, %s77
      %s101 = sphi 0, %s103
      %s104 = sphi 0, %s101
      %s105 = sphi 0, %s104
      %s121 = sphi 0, %s105
      %s129 = sphi 0, %s131
      %s132 = sphi 0, %s129
      %s133 = sphi 0, %s132
      %s149 = sphi 0, %s133
    $region4: #{tpu_custom_call.1} parent=1 // loop_header_branch
      %19 = sbr.rel (%p17) target = $region8
    $region5: #{tpu_custom_call.1} parent=1 // loop_body
      %s21 = ssub.s32 %s16, 1
      %s22 = ssub.s32 %s16, 2
      %s32 = sadd.s32 1, %s25
      %p33 = scmp.ge.s32.totalorder %s32, 1
      %s34 = scalar_select %p33, 0, %s32
      %s35 = sadd.s32 1, %s24
      %s36 = scalar_select %p33, %s35, %s24
      %p37 = scmp.ge.s32.totalorder %s36, 1
      %s38 = scalar_select %p37, 0, %s36
      %s39 = sadd.s32 1, %s23
      %s40 = scalar_select %p37, %s39, %s23
      %p41 = scmp.ge.s32.totalorder %s40, 2
      %s42 = scalar_select %p41, 0, %s40
      %s43 = ssub.s32 %s24, %s38
      %p44 = scmp.eq.s32.totalorder %s43, 0
      %s46 = sadd.s32 %s45, 1
      %s47 = scalar_select %p44, %s45, %s46
      %p50 = pneg %p44
      %p51 = scmp.eq.s32.totalorder %s16, 1
      %p52 = por %p50, %p51
      %p53 = scmp.ne.s32.totalorder %s45, %s48
      %p54 = scmp.eq.s32.totalorder %s16, 0
      %p55 = por %p53, %p54
      %p56 = scmp.ne.s32.totalorder %s45, %s48
      %p57 = scmp.eq.s32.totalorder %s21, 1
      %p58 = por %p56, %p57
      %p59 = scmp.ne.s32.totalorder %s48, %s49
      %p60 = scmp.eq.s32.totalorder %s21, 0
      %p61 = por %p59, %p60
      %p62 = scmp.ne.s32.totalorder %s48, %s49
      %p63 = scmp.eq.s32.totalorder %s22, 1
      %p64 = por %p62, %p63
      %p66 = scmp.ne.s32.totalorder %s49, %s65
      %p67 = scmp.eq.s32.totalorder %s22, 0
      %p68 = por %p66, %p67
      %s69 = ssub.s32 %s23, %s42
      %s70 = ssub.s32 %s25, %s34
      %s71 = sor.u32 %s69, %s70
      %p72 = scmp.eq.s32.totalorder %s71, 0
      %s74 = sadd.s32 %s73, 1
      %s75 = scalar_select %p72, %s73, %s74
      %p78 = pneg %p72
      %p79 = scmp.eq.s32.totalorder %s16, 1
      %p80 = por %p78, %p79
      %p81 = scmp.ne.s32.totalorder %s73, %s76
      %p82 = scmp.eq.s32.totalorder %s16, 0
      %p83 = por %p81, %p82
      %p84 = scmp.ne.s32.totalorder %s73, %s76
      %p85 = scmp.eq.s32.totalorder %s21, 1
      %p86 = por %p84, %p85
      %p87 = scmp.ne.s32.totalorder %s76, %s77
      %p88 = scmp.eq.s32.totalorder %s21, 0
      %p89 = por %p87, %p88
      %p90 = scmp.ne.s32.totalorder %s76, %s77
      %p91 = scmp.eq.s32.totalorder %s22, 1
      %p92 = por %p90, %p91
      %p94 = scmp.ne.s32.totalorder %s77, %s93
      %p95 = scmp.eq.s32.totalorder %s22, 0
      %p96 = por %p94, %p95
      %s97 = ssub.s32 %s23, %s42
      %s98 = ssub.s32 %s24, %s38
      %s99 = sor.u32 %s97, %s98
      %p100 = scmp.eq.s32.totalorder %s99, 0
      %s102 = sadd.s32 %s101, 1
      %s103 = scalar_select %p100, %s101, %s102
      %p106 = pneg %p100
      %p107 = scmp.eq.s32.totalorder %s16, 1
      %p108 = por %p106, %p107
      %p109 = scmp.ne.s32.totalorder %s101, %s104
      %p110 = scmp.eq.s32.totalorder %s16, 0
      %p111 = por %p109, %p110
      %p112 = scmp.ne.s32.totalorder %s101, %s104
      %p113 = scmp.eq.s32.totalorder %s21, 1
      %p114 = por %p112, %p113
      %p115 = scmp.ne.s32.totalorder %s104, %s105
      %p116 = scmp.eq.s32.totalorder %s21, 0
      %p117 = por %p115, %p116
      %p118 = scmp.ne.s32.totalorder %s104, %s105
      %p119 = scmp.eq.s32.totalorder %s22, 1
      %p120 = por %p118, %p119
      %p122 = scmp.ne.s32.totalorder %s105, %s121
      %p123 = scmp.eq.s32.totalorder %s22, 0
      %p124 = por %p122, %p123
      %s125 = ssub.s32 %s23, %s42
      %s126 = ssub.s32 %s24, %s38
      %s127 = sor.u32 %s125, %s126
      %p128 = scmp.eq.s32.totalorder %s127, 0
      %s130 = sadd.s32 %s129, 1
      %s131 = scalar_select %p128, %s129, %s130
      %p134 = pneg %p128
      %p135 = scmp.eq.s32.totalorder %s16, 1
      %p136 = por %p134, %p135
      %p137 = scmp.ne.s32.totalorder %s129, %s132
      %p138 = scmp.eq.s32.totalorder %s16, 0
      %p139 = por %p137, %p138
      %p140 = scmp.ne.s32.totalorder %s129, %s132
      %p141 = scmp.eq.s32.totalorder %s21, 1
      %p142 = por %p140, %p141
      %p143 = scmp.ne.s32.totalorder %s132, %s133
      %p144 = scmp.eq.s32.totalorder %s21, 0
      %p145 = por %p143, %p144
      %p146 = scmp.ne.s32.totalorder %s132, %s133
      %p147 = scmp.eq.s32.totalorder %s22, 1
      %p148 = por %p146, %p147
      %p150 = scmp.ne.s32.totalorder %s133, %s149
      %p151 = scmp.eq.s32.totalorder %s22, 0
      %p152 = por %p150, %p151
      %p153 = scmp.le.s32.totalorder 1, %s16
      %p154 = scmp.lt.s32.totalorder %s16, 3
      %p155 = pnand %p153, %p154
      %p156 = pneg %p155
      // Predicated region
      $region9: #{tpu_custom_call.1} parent=5 // pred_check
        _
      $region10: #{tpu_custom_call.1} parent=5 // pred_check_branch
        %158 = sbr.rel (%p155) target = $region12
      $region11: #{tpu_custom_call.1} parent=5 // pred_region
        %s159 = ssub.s32 %s16, 1
        // Predicated region
        $region13: #{tpu_custom_call.1} parent=11 // pred_check
          %p160 = pneg %p61
        $region14: #{tpu_custom_call.1} parent=11 // pred_check_branch
          %162 = sbr.rel (%p160) target = $region16
        $region15: #{tpu_custom_call.1} parent=11 // pred_region
          %s163 = smul.u32 2, %s27
          %s165 = ssub.s32 64, 64
          %166 = vsyncadd [#allocation4], %s165
          %s167 = smul.addr %s163, 32
          %s168 = scalar_lea.hbm %s0, %s167
          %s170 = sshll.u32 [#allocation3], 4
          %s171 = int_to_ptr.vmem [resolvable:$true] %s170
          %173 = dma.hbm_to_vmem [thread:$0]  %s168, 64, %s171, [#allocation4]
        $region16: #{tpu_custom_call.1} parent=11 // pred_fallthru
          _
      $region12: #{tpu_custom_call.1} parent=5 // pred_fallthru
        _
      %p174 = scmp.lt.s32.totalorder %s16, 2
      // Predicated region
      $region17: #{tpu_custom_call.1} parent=5 // pred_check
        %p175 = pneg %p174
      $region18: #{tpu_custom_call.1} parent=5 // pred_check_branch
        %177 = sbr.rel (%p175) target = $region20
      $region19: #{tpu_custom_call.1} parent=5 // pred_region
        // Predicated region
        $region21: #{tpu_custom_call.1} parent=19 // pred_check
          %p178 = pneg %p83
        $region22: #{tpu_custom_call.1} parent=19 // pred_check_branch
          %180 = sbr.rel (%p178) target = $region24
        $region23: #{tpu_custom_call.1} parent=19 // pred_region
          %s181 = sand.u32 %s16, 1
          %s182 = scalar_lea.sflag [#allocation7], %s181
          %s183 = sand.u32 %s73, 1
          %s184 = smul.addr %s183, 32
          %s185 = scalar_lea.vmem [#allocation6], %s184
          %s186 = smul.u32 2, %s25
          %s188 = ssub.s32 512, 512
          %189 = vsyncadd %s182, %s188
          %s190 = smul.addr %s23, 8
          %s191 = sadd.s32 %s186, %s190
          %s192 = smul.addr %s191, 64
          %s193 = scalar_lea.hbm %s1, %s192
          %s194 = sshll.u32 %s185, 4
          %s195 = int_to_ptr.vmem [resolvable:$true] %s194
          %200 = dma.hbm_to_vmem [thread:$0]  %s193, 512, %s195, %s182, 64, 64, 4
        $region24: #{tpu_custom_call.1} parent=19 // pred_fallthru
          _
        // Predicated region
        $region25: #{tpu_custom_call.1} parent=19 // pred_check
          %p201 = pneg %p111
        $region26: #{tpu_custom_call.1} parent=19 // pred_check_branch
          %203 = sbr.rel (%p201) target = $region28
        $region27: #{tpu_custom_call.1} parent=19 // pred_region
          %s204 = sand.u32 %s16, 1
          %s205 = scalar_lea.sflag [#allocation7], %s204
          %s206 = sand.u32 %s101, 1
          %s207 = smul.addr %s206, 4
          %s208 = scalar_lea.vmem [#allocation8], %s207
          %s209 = smul.u32 2, %s24
          %s211 = ssub.s32 64, 64
          %212 = vsyncadd %s205, %s211
          %s213 = smul.addr %s23, 2
          %s214 = sadd.s32 %s209, %s213
          %s215 = smul.addr %s214, 32
          %s216 = scalar_lea.hbm %s2, %s215
          %s218 = sshll.u32 %s208, 4
          %s219 = int_to_ptr.vmem [resolvable:$true] %s218
          %221 = dma.hbm_to_vmem [thread:$0]  %s216, 64, %s219, %s205
        $region28: #{tpu_custom_call.1} parent=19 // pred_fallthru
          _
      $region20: #{tpu_custom_call.1} parent=5 // pred_fallthru
        _
      %p222 = scmp.le.s32.totalorder 1, %s16
      %p223 = scmp.lt.s32.totalorder %s16, 3
      %p224 = pnand %p222, %p223
      %p225 = pneg %p224
      // Predicated region
      $region29: #{tpu_custom_call.1} parent=5 // pred_check
        _
      $region30: #{tpu_custom_call.1} parent=5 // pred_check_branch
        %227 = sbr.rel (%p224) target = $region32
      $region31: #{tpu_custom_call.1} parent=5 // pred_region
        %s228 = ssub.s32 %s16, 1
        // Predicated region
        $region33: #{tpu_custom_call.1} parent=31 // pred_check
          %p229 = pneg %p61
        $region34: #{tpu_custom_call.1} parent=31 // pred_check_branch
          %231 = sbr.rel (%p229) target = $region36
        $region35: #{tpu_custom_call.1} parent=31 // pred_region
          %232 = dma.done [#allocation4], 64
        $region36: #{tpu_custom_call.1} parent=31 // pred_fallthru
          _
        %s233 = sand.u32 %s21, 1
        %s234 = scalar_lea.sflag [#allocation7], %s233
        %s235 = sand.u32 %s76, 1
        %s236 = smul.addr %s235, 32
        %s237 = scalar_lea.vmem [#allocation6], %s236
        // Predicated region
        $region37: #{tpu_custom_call.1} parent=31 // pred_check
          %p238 = pneg %p89
        $region38: #{tpu_custom_call.1} parent=31 // pred_check_branch
          %240 = sbr.rel (%p238) target = $region40
        $region39: #{tpu_custom_call.1} parent=31 // pred_region
          %241 = dma.done %s234, 512
        $region40: #{tpu_custom_call.1} parent=31 // pred_fallthru
          _
        %s242 = sand.u32 %s21, 1
        %s243 = scalar_lea.sflag [#allocation7], %s242
        %s244 = sand.u32 %s104, 1
        %s245 = smul.addr %s244, 4
        %s246 = scalar_lea.vmem [#allocation8], %s245
        // Predicated region
        $region41: #{tpu_custom_call.1} parent=31 // pred_check
          %p247 = pneg %p117
        $region42: #{tpu_custom_call.1} parent=31 // pred_check_branch
          %249 = sbr.rel (%p247) target = $region44
        $region43: #{tpu_custom_call.1} parent=31 // pred_region
          %250 = dma.done %s243, 64
        $region44: #{tpu_custom_call.1} parent=31 // pred_fallthru
          _
        %p251 = pneg %p61
        %p252 = pneg %p58
        %s253 = sand.u32 %s21, 1
        %s254 = scalar_lea.sflag [#allocation7], %s253
        %s255 = sand.u32 %s76, 1
        %s256 = smul.addr %s255, 32
        %s257 = scalar_lea.vmem [#allocation6], %s256
        %p258 = pneg %p89
        %p259 = pneg %p86
        %s260 = sand.u32 %s21, 1
        %s261 = scalar_lea.sflag [#allocation7], %s260
        %s262 = sand.u32 %s104, 1
        %s263 = smul.addr %s262, 4
        %s264 = scalar_lea.vmem [#allocation8], %s263
        %p265 = pneg %p117
        %p266 = pneg %p114
        %p267 = pneg %p145
        %p268 = pneg %p142
        %s269 = sand.u32 %s132, 1
        %s270 = scalar_lea.sflag [#allocation5], %s269
        %s271 = sand.u32 %s132, 1
        %s272 = smul.addr %s271, 8
        %s273 = scalar_lea.vmem [#allocation9], %s272
        %s274 = smul.u32 2, %s27
        %s275 = smul.u32 2, %s28
        %s276 = smul.u32 2, %s27
        %s277 = smul.u32 2, %s27
        %p279 = scmp.eq.s32.totalorder %s28, 0
        // Predicated region
        $region45: #{tpu_custom_call.1} parent=31 // pred_check
          %p280 = pneg %p279
        $region46: #{tpu_custom_call.1} parent=31 // pred_check_branch
          %282 = sbr.rel (%p280) target = $region48
        $region47: #{tpu_custom_call.1} parent=31 // pred_region
          %283 = vst [vmem:[#allocation2] sm:$0xff] 0.0
        $region48: #{tpu_custom_call.1} parent=31 // pred_fallthru
          _
        %v284 = vld [vmem:[#allocation3] sm:$0xf]
        %v285 = vld [vmem:[%s246] sm:$0xf]
        %v286 = vadd.f32 %v284, %v285
        %v287 = vmax.f32 %v286, 0.0
        %v288 = vmin.f32 %v287, 15.0
        %v289 = vlaneseq
        %v290 = vshrl.u32 %v289, 7
        %v291 = vadd.s32 %v290, 8
        %v292 = vcvt.s32.f32 %v290
        %v293 = vcvt.s32.f32 %v291
        %v295 = vlaneseq
        %v296 = vshrl.u32 %v295, 7
        %v297 = vsub.s32 0, %v296
        %v298 = vrot.slane %v288, %v297
        %v299 = vlaneseq
        %v300 = vshrl.u32 %v299, 7
        %v301 = vsub.s32 2, %v300
        %v302 = vrot.slane %v288, %v301
        %v305 = vlaneseq
        %v306 = vshrl.u32 %v305, 7
        %v307 = vsub.s32 0, %v306
        %v308 = vrot.slane %v298, %v307
        %v309 = vlaneseq
        %v310 = vshrl.u32 %v309, 7
        %v311 = vsub.s32 0, %v310
        %v312 = vrot.slane %v302, %v311
        %v313 = vsub.f32 %v292, %v308
        %v314 = vsub.f32 %v292, %v312
        %v315 = vsub.f32 %v293, %v308
        %v316 = vsub.f32 %v293, %v312
        %v317 = vand.u32 2147483647, %v313
        %v318 = vand.u32 2147483647, %v314
        %v319 = vand.u32 2147483647, %v315
        %v320 = vand.u32 2147483647, %v316
        %v321 = vsub.f32 1.0, %v317
        %v322 = vsub.f32 1.0, %v318
        %v323 = vsub.f32 1.0, %v319
        %v324 = vsub.f32 1.0, %v320
        %v325 = vmax.f32 %v321, 0.0
        %v326 = vmax.f32 %v322, 0.0
        %v327 = vmax.f32 %v323, 0.0
        %v328 = vmax.f32 %v324, 0.0
        %v329 = vpack.c.bf16 %v327, %v325
        %v330 = vpack.c.bf16 %v328, %v326
        %s331 = smul.u32 %s28, 16
        %s332 = scvt.s32.f32 %s331
        %v333 = vstv %s332
        %v334 = vadd.f32 %v292, %v333
        %v335 = vadd.f32 %v293, %v333
        %v336 = vlaneseq
        %v337 = vshrl.u32 %v336, 7
        %v338 = vsub.s32 1, %v337
        %v339 = vrot.slane %v288, %v338
        %v340 = vlaneseq
        %v341 = vshrl.u32 %v340, 7
        %v342 = vsub.s32 3, %v341
        %v343 = vrot.slane %v288, %v342
        %v346 = vlaneseq
        %v347 = vshrl.u32 %v346, 7
        %v348 = vsub.s32 1, %v347
        %v349 = vrot.slane %v339, %v348
        %v350 = vlaneseq
        %v351 = vshrl.u32 %v350, 7
        %v352 = vsub.s32 1, %v351
        %v353 = vrot.slane %v343, %v352
        %v354 = vsub.f32 %v334, %v349
        %v355 = vsub.f32 %v334, %v353
        %v356 = vsub.f32 %v335, %v349
        %v357 = vsub.f32 %v335, %v353
        %v358 = vand.u32 2147483647, %v354
        %v359 = vand.u32 2147483647, %v355
        %v360 = vand.u32 2147483647, %v356
        %v361 = vand.u32 2147483647, %v357
        %v362 = vsub.f32 1.0, %v358
        %v363 = vsub.f32 1.0, %v359
        %v364 = vsub.f32 1.0, %v360
        %v365 = vsub.f32 1.0, %v361
        %v366 = vmax.f32 %v362, 0.0
        %v367 = vmax.f32 %v363, 0.0
        %v368 = vmax.f32 %v364, 0.0
        %v369 = vmax.f32 %v365, 0.0
        %v370 = vld [vmem:[%s237] sm:$0xf]
        %v371 = vld [vmem:[%s237 + $0x4] sm:$0xf]
        %v372 = vld [vmem:[%s237 + $0x8] sm:$0xf]
        %v373 = vld [vmem:[%s237 + $0xc] sm:$0xf]
        %v374 = vld [vmem:[%s237 + $0x10] sm:$0xf]
        %v375 = vld [vmem:[%s237 + $0x14] sm:$0xf]
        %v376 = vld [vmem:[%s237 + $0x18] sm:$0xf]
        %v377 = vld [vmem:[%s237 + $0x1c] sm:$0xf]
        %v386 = vunpack.c.l.b16 %v370
        %v387 = vunpack.c.l.b16 %v371
        %v388 = vunpack.c.l.b16 %v372
        %v389 = vunpack.c.l.b16 %v373
        %v390 = vunpack.c.l.b16 %v374
        %v391 = vunpack.c.l.b16 %v375
        %v392 = vunpack.c.l.b16 %v376
        %v393 = vunpack.c.l.b16 %v377
        %v394 = vpack.c.b16 %v387, %v386
        %v395 = vpack.c.b16 %v389, %v388
        %v396 = vpack.c.b16 %v391, %v390
        %v397 = vpack.c.b16 %v393, %v392
        %vm398 = vcmask 130048
        %v400 = vsel %vm398, %v394, 0
        %v403 = vsel %vm398, %v395, 0
        %v406 = vsel %vm398, %v396, 0
        %v409 = vsel %vm398, %v397, 0
        %411 = vmatprep.subr.bf16.mxu0 0
        %412 = vmatpush1.bf16.msra.mxu0 0
        %413 = vmatprep.subr.bf16.mxu0 0
        %414 = vmatpush1.bf16.msra.mxu0 0
        %415 = vmatprep.subr.bf16.mxu0 0
        %416 = vmatpush1.bf16.msra.mxu0 0
        %417 = vmatprep.subr.bf16.mxu0 0
        %418 = vmatpush1.bf16.msra.mxu0 0
        %419 = vmatprep.subr.bf16.mxu0 0
        %420 = vmatpush1.bf16.msra.mxu0 0
        %421 = vmatprep.subr.bf16.mxu0 0
        %422 = vmatpush1.bf16.msra.mxu0 0
        %423 = vmatprep.subr.bf16.mxu0 0
        %424 = vmatpush1.bf16.msra.mxu0 0
        %425 = vmatprep.subr.bf16.mxu0 %v330
        %426 = vmatpush1.bf16.msra.mxu0 %v329
        %427 = vmatprep.subr.bf16.mxu0 0
        %428 = vmatpush2.bf16.msra.mxu0 0
        %429 = vmatprep.subr.bf16.mxu0 0
        %430 = vmatpush2.bf16.msra.mxu0 0
        %431 = vmatprep.subr.bf16.mxu0 0
        %432 = vmatpush2.bf16.msra.mxu0 0
        %433 = vmatprep.subr.bf16.mxu0 0
        %434 = vmatpush2.bf16.msra.mxu0 0
        %435 = vmatprep.subr.bf16.mxu0 0
        %436 = vmatpush2.bf16.msra.mxu0 0
        %437 = vmatprep.subr.bf16.mxu0 0
        %438 = vmatpush2.bf16.msra.mxu0 0
        %439 = vmatprep.subr.bf16.mxu0 0
        %440 = vmatpush2.bf16.msra.mxu0 0
        %441 = vmatprep.subr.bf16.mxu0 0
        %442 = vmatpush2.bf16.msra.mxu0 0
        %443 = vmatprep.mubr.bf16.mxu0 0
        %444 = vmatmul.mubr.bf16.gmra.mxu0 %v400
        %v445 = vpop.f32.mrf.mxu0
        %v446 = vadd.f32 0.0, %v445
        %v447 = vpop.f32.mrf.mxu0
        %v448 = vadd.f32 0.0, %v447
        %v449 = vpop.f32.mrf.mxu0
        %v450 = vadd.f32 0.0, %v449
        %v451 = vpop.f32.mrf.mxu0
        %v452 = vadd.f32 0.0, %v451
        %453 = vmatprep.mubr.bf16.mxu0 0
        %454 = vmatmul.mubr.bf16.gmra.mxu0 %v403
        %v455 = vpop.f32.mrf.mxu0
        %v456 = vadd.f32 0.0, %v455
        %v457 = vpop.f32.mrf.mxu0
        %v458 = vadd.f32 0.0, %v457
        %v459 = vpop.f32.mrf.mxu0
        %v460 = vadd.f32 0.0, %v459
        %v461 = vpop.f32.mrf.mxu0
        %v462 = vadd.f32 0.0, %v461
        %463 = vmatprep.mubr.bf16.mxu0 0
        %464 = vmatmul.mubr.bf16.gmra.mxu0 %v406
        %v465 = vpop.f32.mrf.mxu0
        %v466 = vadd.f32 0.0, %v465
        %v467 = vpop.f32.mrf.mxu0
        %v468 = vadd.f32 0.0, %v467
        %v469 = vpop.f32.mrf.mxu0
        %v470 = vadd.f32 0.0, %v469
        %v471 = vpop.f32.mrf.mxu0
        %v472 = vadd.f32 0.0, %v471
        %473 = vmatprep.mubr.bf16.mxu0 0
        %474 = vmatmul.mubr.bf16.gmra.mxu0 %v409
        %v475 = vpop.f32.mrf.mxu0
        %v476 = vadd.f32 0.0, %v475
        %v477 = vpop.f32.mrf.mxu0
        %v478 = vadd.f32 0.0, %v477
        %v479 = vpop.f32.mrf.mxu0
        %v480 = vadd.f32 0.0, %v479
        %v481 = vpop.f32.mrf.mxu0
        %v482 = vadd.f32 0.0, %v481
        %483 = vdwg.mxu0
        %v484 = vld [vmem:[#allocation2] sm:$0xff]
        %v485 = vmul.f32 %v446, %v366
        %v486 = vmul.f32 %v448, %v367
        %v487 = vmul.f32 %v450, %v368
        %v488 = vmul.f32 %v452, %v369
        %v489 = vmul.f32 %v456, %v366
        %v490 = vmul.f32 %v458, %v367
        %v491 = vmul.f32 %v460, %v368
        %v492 = vmul.f32 %v462, %v369
        %v493 = vmul.f32 %v466, %v366
        %v494 = vmul.f32 %v468, %v367
        %v495 = vmul.f32 %v470, %v368
        %v496 = vmul.f32 %v472, %v369
        %v497 = vmul.f32 %v476, %v366
        %v498 = vmul.f32 %v478, %v367
        %v499 = vmul.f32 %v480, %v368
        %v500 = vmul.f32 %v482, %v369
        %v501 = vadd.f32 %v485, %v487
        %v502 = vrot.slane %v501, 4
        %v503 = vadd.f32 %v501, %v502
        %v504 = vrot.slane %v503, 2
        %v505 = vadd.f32 %v503, %v504
        %v506 = vrot.slane %v505, 1
        %v507 = vadd.f32 %v505, %v506
        %v508 = vadd.f32 %v486, %v488
        %v509 = vrot.slane %v508, 4
        %v510 = vadd.f32 %v508, %v509
        %v511 = vrot.slane %v510, 2
        %v512 = vadd.f32 %v510, %v511
        %v513 = vrot.slane %v512, 1
        %v514 = vadd.f32 %v512, %v513
        %v515 = vadd.f32 %v489, %v491
        %v516 = vrot.slane %v515, 4
        %v517 = vadd.f32 %v515, %v516
        %v518 = vrot.slane %v517, 2
        %v519 = vadd.f32 %v517, %v518
        %v520 = vrot.slane %v519, 1
        %v521 = vadd.f32 %v519, %v520
        %v522 = vadd.f32 %v490, %v492
        %v523 = vrot.slane %v522, 4
        %v524 = vadd.f32 %v522, %v523
        %v525 = vrot.slane %v524, 2
        %v526 = vadd.f32 %v524, %v525
        %v527 = vrot.slane %v526, 1
        %v528 = vadd.f32 %v526, %v527
        %v529 = vadd.f32 %v493, %v495
        %v530 = vrot.slane %v529, 4
        %v531 = vadd.f32 %v529, %v530
        %v532 = vrot.slane %v531, 2
        %v533 = vadd.f32 %v531, %v532
        %v534 = vrot.slane %v533, 1
        %v535 = vadd.f32 %v533, %v534
        %v536 = vadd.f32 %v494, %v496
        %v537 = vrot.slane %v536, 4
        %v538 = vadd.f32 %v536, %v537
        %v539 = vrot.slane %v538, 2
        %v540 = vadd.f32 %v538, %v539
        %v541 = vrot.slane %v540, 1
        %v542 = vadd.f32 %v540, %v541
        %v543 = vadd.f32 %v497, %v499
        %v544 = vrot.slane %v543, 4
        %v545 = vadd.f32 %v543, %v544
        %v546 = vrot.slane %v545, 2
        %v547 = vadd.f32 %v545, %v546
        %v548 = vrot.slane %v547, 1
        %v549 = vadd.f32 %v547, %v548
        %v550 = vadd.f32 %v498, %v500
        %v551 = vrot.slane %v550, 4
        %v552 = vadd.f32 %v550, %v551
        %v553 = vrot.slane %v552, 2
        %v554 = vadd.f32 %v552, %v553
        %v555 = vrot.slane %v554, 1
        %v556 = vadd.f32 %v554, %v555
        %v565 = vcombine.low %v507, %v514
        %v566 = vcombine.low %v521, %v528
        %v567 = vcombine.low %v535, %v542
        %v568 = vcombine.low %v549, %v556
        %v569 = vrot.slane %v566, 7
        %vm570 = vcmask 1041409
        %v571 = vsel %vm570, %v569, %v565
        %vm572 = vcmask 1045509
        %v573 = vsel %vm572, %v569, %v571
        %v574 = vrot.slane %v567, 6
        %vm575 = vcmask 1042434
        %v576 = vsel %vm575, %v574, %v573
        %vm577 = vcmask 1046534
        %v578 = vsel %vm577, %v574, %v576
        %v579 = vrot.slane %v568, 5
        %vm580 = vcmask 1043459
        %v581 = vsel %vm580, %v579, %v578
        %vm582 = vcmask 1047559
        %v583 = vsel %vm582, %v579, %v581
        %v585 = vadd.f32 %v484, %v583
        %586 = vst [vmem:[#allocation2] sm:$0xff] %v585
        // Predicated region
        $region49: #{tpu_custom_call.1} parent=31 // pred_check
          %p587 = pneg %p279
        $region50: #{tpu_custom_call.1} parent=31 // pred_check_branch
          %589 = sbr.rel (%p587) target = $region52
        $region51: #{tpu_custom_call.1} parent=31 // pred_region
          %v590 = vld [vmem:[#allocation2] sm:$0xff]
          %591 = vst [vmem:[%s273] sm:$0xff] %v590
        $region52: #{tpu_custom_call.1} parent=31 // pred_fallthru
          _
        %s592 = sand.u32 %s132, 1
        %s593 = scalar_lea.sflag [#allocation5], %s592
        %s594 = sand.u32 %s132, 1
        %s595 = smul.addr %s594, 8
        %s596 = scalar_lea.vmem [#allocation9], %s595
        // Predicated region
        $region53: #{tpu_custom_call.1} parent=31 // pred_check
          %p597 = pneg %p142
        $region54: #{tpu_custom_call.1} parent=31 // pred_check_branch
          %599 = sbr.rel (%p597) target = $region56
        $region55: #{tpu_custom_call.1} parent=31 // pred_region
          %s600 = smul.u32 2, %s27
          %s602 = ssub.s32 128, 128
          %603 = vsyncadd %s593, %s602
          %s604 = smul.addr %s26, 2
          %s605 = sadd.s32 %s600, %s604
          %s606 = smul.addr %s605, 64
          %s607 = scalar_lea.hbm %s3, %s606
          %s609 = sshll.u32 %s596, 4
          %s610 = int_to_ptr.vmem [resolvable:$true] %s609
          %612 = dma.vmem_to_hbm [thread:$0]  %s610, 128, %s607, %s593
        $region56: #{tpu_custom_call.1} parent=31 // pred_fallthru
          _
      $region32: #{tpu_custom_call.1} parent=5 // pred_fallthru
        _
      %p613 = scmp.le.s32.totalorder 2, %s16
      // Predicated region
      $region57: #{tpu_custom_call.1} parent=5 // pred_check
        %p614 = pneg %p613
      $region58: #{tpu_custom_call.1} parent=5 // pred_check_branch
        %616 = sbr.rel (%p614) target = $region60
      $region59: #{tpu_custom_call.1} parent=5 // pred_region
        %s617 = ssub.s32 %s16, 2
        // Predicated region
        $region61: #{tpu_custom_call.1} parent=59 // pred_check
          %p618 = pneg %p148
        $region62: #{tpu_custom_call.1} parent=59 // pred_check_branch
          %620 = sbr.rel (%p618) target = $region64
        $region63: #{tpu_custom_call.1} parent=59 // pred_region
          %s621 = sand.u32 %s133, 1
          %s622 = scalar_lea.sflag [#allocation5], %s621
          %s623 = sand.u32 %s133, 1
          %s624 = smul.addr %s623, 8
          %s625 = scalar_lea.vmem [#allocation9], %s624
          %626 = dma.done %s622, 128
        $region64: #{tpu_custom_call.1} parent=59 // pred_fallthru
          _
      $region60: #{tpu_custom_call.1} parent=5 // pred_fallthru
        _
    $region6: #{tpu_custom_call.1} parent=1 // loop_footer
      %s20 = sadd.s32 1, %s16
    $region7: #{tpu_custom_call.1} parent=1 // loop_footer_branch
      %15 = sbr.rel target = $region3
    $region8: #{tpu_custom_call.1} parent=1 // loop_exit
      _
    %627 = vsyncpa [#allocation4], 1
    %s628 = scalar_lea.sflag [#allocation4], 1
    %629 = vsyncpa %s628, 1
    %630 = vsyncpa [#allocation7], 1
    %s631 = scalar_lea.sflag [#allocation7], 1
    %632 = vsyncpa %s631, 1
    %633 = vsyncpa [#allocation5], 1
    %s634 = scalar_lea.sflag [#allocation5], 1
    %635 = vsyncpa %s634, 1

</llo_original>
